<compile_context>
chip_gen: v7x
topology: tpu7x:2x2x1
jax: 0.10.0
libtpu: 0.0.40
codegen_flags: <defaults>
</compile_context>

<pallas_src>
import jax
import jax.numpy as jnp
from jax.experimental import pallas as pl
from jax.experimental.pallas import tpu as pltpu

N_NODES = 128
IN_FEATS = 32
HIDDEN = 32
NUM_CLASSES = 8
NUM_LAYERS = 3
BN_EPS = 1e-5


# ---------------- fully fused forward kernel (node dim on lanes) ----------------
def _make_kernel(num_layers):
    def kernel(wsm_ref,                       # SMEM [L]: softmax(layer weights)
               xT_ref,                        # (Fin, N)   bf16
               aT_ref,                        # (N, N)     bf16 binary adjacency^T
               invdeg_ref,                    # (1, N)     f32  1/deg (mean agg)
               wbuf_ref,                      # (2+2L,H,H) bf16 packed transposed weights
               bbuf_ref,                      # (2+L,H,N)  f32  packed pre-broadcast biases
               oT_ref):                       # (C, N)     f32  log-probs (transposed)
        c = oT_ref.shape[0]

        # input_fc: h_T = W_in^T @ x_T + b_in   (H on sublanes, N on lanes)
        h = jnp.dot(wbuf_ref[0], xT_ref[...],
                    preferred_element_type=jnp.float32) + bbuf_ref[0]
        xi = 0.2 * h                           # 0.2 * x_input, hoisted out of the loop
        aT = aT_ref[...]
        inv_deg = invdeg_ref[...]              # (1, N) f32, broadcast over sublanes

        ens = None
        prev = None
        for l in range(num_layers):            # tiny static unroll (L = 3)
            h_b = h.astype(jnp.bfloat16)        # one bf16 cast, reused by both matmuls
            # mean aggregation: (H,N)@(N,N) on the MXU, then exact f32 1/deg scale
            agg = jnp.dot(h_b, aT, preferred_element_type=jnp.float32) * inv_deg
            # SAGEConv + folded BatchNorm: z = W_l'^T @ agg + W_r'^T @ h + b'
            z = (jnp.dot(wbuf_ref[1 + l], agg.astype(jnp.bfloat16),
                         preferred_element_type=jnp.float32)
                 + jnp.dot(wbuf_ref[1 + num_layers + l], h_b,
                           preferred_element_type=jnp.float32)
                 + bbuf_ref[1 + l])
            z = jnp.maximum(z, 0.0)             # ReLU (BN already folded)
            # TODO(synk): F.dropout(p=0.5) is identity in eval mode; training-mode RNG
            # dropout is not implemented here.
            if l == 0:
                h = z + xi
                ens = wsm_ref[0] * h            # init ensemble from layer 0
            else:
                h = z + xi + 0.7 * prev
                ens = ens + wsm_ref[l] * h
            prev = h

        # out_fc (W_out^T zero-padded to H rows) + log_softmax over the class axis
        logits = (jnp.dot(wbuf_ref[1 + 2 * num_layers], ens.astype(jnp.bfloat16),
                          preferred_element_type=jnp.float32)
                  + bbuf_ref[1 + num_layers])
        logits = logits[:c, :]                  # first f32 vreg; padded rows dropped
        zc = logits - jnp.max(logits, axis=0, keepdims=True)
        oT_ref[...] = zc - jnp.log(jnp.sum(jnp.exp(zc), axis=0, keepdims=True))

    return kernel


# ---------------- one-time parameter preparation (NOT in the per-call path) ------
def prepare_params(adj_bin, w_in, b_in, w_l, b_l, w_r,
                   gammas, betas, rmeans, rvars, w_out, b_out, layer_weights):
    n = adj_bin.shape[0]
    fin, hdim = w_in.shape
    c = w_out.shape[1]
    num_layers = len(w_l)
    assert fin == hdim, "packed weight buffer assumes in_feats == hidden"

    # mean-aggregation helpers: binary A^T in bf16 (exact), f32 1/deg row
    deg = jnp.sum(adj_bin, axis=1)
    inv_deg = (1.0 / jnp.maximum(deg, 1.0)).reshape(1, n).astype(jnp.float32)
    aT = adj_bin.T.astype(jnp.bfloat16)

    # fold eval-mode BatchNorm into the SAGE weights / bias (transposed layout):
    #   BN(h) = h*s + (beta - rmean*s),  s = gamma / sqrt(rvar + eps)
    w_slots = [w_in.T]                                     # slot 0: W_in^T (H, Fin)
    b_fold = []
    wl_T, wr_T = [], []
    for i in range(num_layers):
        s = gammas[i] * jax.lax.rsqrt(rvars[i] + BN_EPS)
        wl_T.append((w_l[i] * s[None, :]).T)               # (H, H)
        wr_T.append((w_r[i] * s[None, :]).T)               # (H, H) lin_r has no bias
        b_fold.append(b_l[i] * s + betas[i] - rmeans[i] * s)
    w_slots += wl_T + wr_T
    wout_T = jnp.zeros((hdim, hdim), jnp.float32).at[:c, :].set(w_out.T)
    w_slots.append(wout_T)                                  # slot 1+2L: W_out^T padded
    wbuf = jnp.stack(w_slots, axis=0).astype(jnp.bfloat16)  # (2+2L, H, H)

    # biases pre-broadcast along the node (lane) axis, f32
    b_slots = [jnp.broadcast_to(b_in[:, None], (hdim, n))]
    b_slots += [jnp.broadcast_to(b[:, None], (hdim, n)) for b in b_fold]
    bout_pad = jnp.zeros((hdim, n), jnp.float32).at[:c, :].set(
        jnp.broadcast_to(b_out[:, None], (c, n)))
    b_slots.append(bout_pad)
    bbuf = jnp.stack(b_slots, axis=0).astype(jnp.float32)   # (2+L, H, N)

    wsm = jax.nn.softmax(layer_weights.astype(jnp.float32)) # (L,) SMEM prefetch

    return dict(aT=aT, inv_deg=inv_deg, wbuf=wbuf, bbuf=bbuf, wsm=wsm)


# ---------------- per-call wrapper: one transpose/cast + one pallas_call ----------
def sage_res_forward(x, params, *, num_classes):
    n, fin = x.shape
    num_layers = params["bbuf"].shape[0] - 2
    xT = x.T.astype(jnp.bfloat16)                           # only per-call prep op

    i2 = lambda i, wsm: (0, 0)
    i3 = lambda i, wsm: (0, 0, 0)
    oT = pl.pallas_call(
        _make_kernel(num_layers),
        out_shape=jax.ShapeDtypeStruct((num_classes, n), jnp.float32),
        grid_spec=pltpu.PrefetchScalarGridSpec(
            num_scalar_prefetch=1,
            grid=(1,),                                      # whole problem fits VMEM
            in_specs=[
                pl.BlockSpec((fin, n), i2),                 # x^T (bf16)
                pl.BlockSpec((n, n), i2),                   # A^T binary (bf16)
                pl.BlockSpec((1, n), i2),                   # inv_deg (f32)
                pl.BlockSpec(params["wbuf"].shape, i3),     # packed weights (bf16)
                pl.BlockSpec(params["bbuf"].shape, i3),     # packed biases (f32)
            ],
            out_specs=pl.BlockSpec((num_classes, n), i2),   # lane-dense (C, N) store
        ),
        compiler_params=pltpu.CompilerParams(dimension_semantics=("arbitrary",)),
    )(params["wsm"], xT, params["aT"], params["inv_deg"],
      params["wbuf"], params["bbuf"])
    return oT.T                                             # back to (N, C)


if __name__ == "__main__":
    key = jax.random.PRNGKey(0)
    keys = jax.random.split(key, 64)
    ki = iter(keys)

    # node features
    x = jax.random.normal(next(ki), (N_NODES, IN_FEATS), jnp.float32)

    # random symmetric binary adjacency (no self loops)
    u = jax.random.uniform(next(ki), (N_NODES, N_NODES))
    adj = (u < 0.05).astype(jnp.float32)
    adj = jnp.maximum(adj, adj.T)
    adj = adj * (1.0 - jnp.eye(N_NODES, dtype=jnp.float32))

    # deterministic parameter init (synthetic; no checkpoint load)
    scale_in = 1.0 / jnp.sqrt(float(IN_FEATS))
    scale_h = 1.0 / jnp.sqrt(float(HIDDEN))
    w_in = jax.random.normal(next(ki), (IN_FEATS, HIDDEN), jnp.float32) * scale_in
    b_in = jax.random.normal(next(ki), (HIDDEN,), jnp.float32) * 0.1

    w_l, b_l, w_r, gammas, betas, rmeans, rvars = [], [], [], [], [], [], []
    for _ in range(NUM_LAYERS):
        w_l.append(jax.random.normal(next(ki), (HIDDEN, HIDDEN), jnp.float32) * scale_h)
        b_l.append(jax.random.normal(next(ki), (HIDDEN,), jnp.float32) * 0.1)
        w_r.append(jax.random.normal(next(ki), (HIDDEN, HIDDEN), jnp.float32) * scale_h)
        gammas.append(1.0 + 0.1 * jax.random.normal(next(ki), (HIDDEN,), jnp.float32))
        betas.append(0.1 * jax.random.normal(next(ki), (HIDDEN,), jnp.float32))
        rmeans.append(0.1 * jax.random.normal(next(ki), (HIDDEN,), jnp.float32))
        rvars.append(0.5 + jax.random.uniform(next(ki), (HIDDEN,), jnp.float32))

    w_out = jax.random.normal(next(ki), (HIDDEN, NUM_CLASSES), jnp.float32) * scale_h
    b_out = jax.random.normal(next(ki), (NUM_CLASSES,), jnp.float32) * 0.1
    layer_weights = jax.random.normal(next(ki), (NUM_LAYERS,), jnp.float32)

    # ---- one-time prep (BN fold, transposes, packing, casts) — not per call ----
    params = prepare_params(adj, w_in, b_in, w_l, b_l, w_r,
                            gammas, betas, rmeans, rvars,
                            w_out, b_out, layer_weights)
    params = jax.tree_util.tree_map(jax.block_until_ready, params)

    # ---------------- fused forward (single pallas_call) ----------------
    fwd = jax.jit(sage_res_forward, static_argnames=("num_classes",))
    out = fwd(x, params, num_classes=NUM_CLASSES)

    out = jax.block_until_ready(out)
    assert out.shape == (N_NODES, NUM_CLASSES)
    assert bool(jnp.all(jnp.isfinite(out)))
    print("KERNEL_OK")
</pallas_src>

<mosaic_0001>
module attributes {stable_mosaic.version = 11 : i64} {
  func.func @kernel(%arg0: i32, %arg1: memref<3xf32, #tpu.memory_space<smem>>, %arg2: memref<32x128xbf16, #tpu.memory_space<vmem>>, %arg3: memref<128x128xbf16, #tpu.memory_space<vmem>>, %arg4: memref<1x128xf32, #tpu.memory_space<vmem>>, %arg5: memref<8x32x32xbf16, #tpu.memory_space<vmem>>, %arg6: memref<5x32x128xf32, #tpu.memory_space<vmem>>, %arg7: memref<8x128xf32, #tpu.memory_space<vmem>>) attributes {dimension_semantics = [#tpu.dimension_semantics<arbitrary>], iteration_bounds = array<i64: 1>, scalar_prefetch = 1 : i64, scratch_operands = 0 : i64, tpu.core_type = #tpu.core_type<tc>, window_params = [{pipeline_mode = #tpu.pipeline_mode<synchronous>, transform_indices = @transform_0, window_bounds = array<i64: 32, 128>}, {pipeline_mode = #tpu.pipeline_mode<synchronous>, transform_indices = @transform_1, window_bounds = array<i64: 128, 128>}, {pipeline_mode = #tpu.pipeline_mode<synchronous>, transform_indices = @transform_2, window_bounds = array<i64: 1, 128>}, {pipeline_mode = #tpu.pipeline_mode<synchronous>, transform_indices = @transform_3, window_bounds = array<i64: 8, 32, 32>}, {pipeline_mode = #tpu.pipeline_mode<synchronous>, transform_indices = @transform_4, window_bounds = array<i64: 5, 32, 128>}, {pipeline_mode = #tpu.pipeline_mode<synchronous>, transform_indices = @transform_5, window_bounds = array<i64: 8, 128>}]} {
    %c0 = arith.constant 0 : index
    %c0_0 = arith.constant 0 : index
    %c0_1 = arith.constant 0 : index
    %0 = vector.load %arg5[%c0, %c0_0, %c0_1] : memref<8x32x32xbf16, #tpu.memory_space<vmem>>, vector<1x32x32xbf16>
    %1 = vector.shape_cast %0 : vector<1x32x32xbf16> to vector<32x32xbf16>
    %c0_2 = arith.constant 0 : index
    %c0_3 = arith.constant 0 : index
    %2 = vector.load %arg2[%c0_2, %c0_3] : memref<32x128xbf16, #tpu.memory_space<vmem>>, vector<32x128xbf16>
    %cst = arith.constant dense<0.000000e+00> : vector<32x128xf32>
    %3 = tpu.matmul %1, %2, %cst {dimension_numbers = #tpu.dot_dimension_numbers<[1], [0], [0], [1], [0, 0, 1, 1], [], []>} : vector<32x32xbf16>, vector<32x128xbf16>, vector<32x128xf32> -> vector<32x128xf32>
    %c0_4 = arith.constant 0 : index
    %c0_5 = arith.constant 0 : index
    %c0_6 = arith.constant 0 : index
    %4 = vector.load %arg6[%c0_4, %c0_5, %c0_6] : memref<5x32x128xf32, #tpu.memory_space<vmem>>, vector<1x32x128xf32>
    %5 = vector.shape_cast %4 : vector<1x32x128xf32> to vector<32x128xf32>
    %6 = arith.addf %3, %5 : vector<32x128xf32>
    %cst_7 = arith.constant 2.000000e-01 : f32
    %7 = vector.broadcast %cst_7 : f32 to vector<32x128xf32>
    %8 = arith.mulf %7, %6 : vector<32x128xf32>
    %c0_8 = arith.constant 0 : index
    %c0_9 = arith.constant 0 : index
    %9 = vector.load %arg3[%c0_8, %c0_9] : memref<128x128xbf16, #tpu.memory_space<vmem>>, vector<128x128xbf16>
    %c0_10 = arith.constant 0 : index
    %c0_11 = arith.constant 0 : index
    %10 = vector.load %arg4[%c0_10, %c0_11] : memref<1x128xf32, #tpu.memory_space<vmem>>, vector<1x128xf32>
    %11 = arith.truncf %6 : vector<32x128xf32> to vector<32x128xbf16>
    %cst_12 = arith.constant dense<0.000000e+00> : vector<32x128xf32>
    %12 = tpu.matmul %11, %9, %cst_12 {dimension_numbers = #tpu.dot_dimension_numbers<[1], [0], [0], [1], [0, 0, 1, 1], [], []>} : vector<32x128xbf16>, vector<128x128xbf16>, vector<32x128xf32> -> vector<32x128xf32>
    %13 = vector.broadcast %10 : vector<1x128xf32> to vector<32x128xf32>
    %14 = arith.mulf %12, %13 : vector<32x128xf32>
    %c1 = arith.constant 1 : index
    %c0_13 = arith.constant 0 : index
    %c0_14 = arith.constant 0 : index
    %15 = vector.load %arg5[%c1, %c0_13, %c0_14] : memref<8x32x32xbf16, #tpu.memory_space<vmem>>, vector<1x32x32xbf16>
    %16 = vector.shape_cast %15 : vector<1x32x32xbf16> to vector<32x32xbf16>
    %17 = arith.truncf %14 : vector<32x128xf32> to vector<32x128xbf16>
    %cst_15 = arith.constant dense<0.000000e+00> : vector<32x128xf32>
    %18 = tpu.matmul %16, %17, %cst_15 {dimension_numbers = #tpu.dot_dimension_numbers<[1], [0], [0], [1], [0, 0, 1, 1], [], []>} : vector<32x32xbf16>, vector<32x128xbf16>, vector<32x128xf32> -> vector<32x128xf32>
    %c4 = arith.constant 4 : index
    %c0_16 = arith.constant 0 : index
    %c0_17 = arith.constant 0 : index
    %19 = vector.load %arg5[%c4, %c0_16, %c0_17] : memref<8x32x32xbf16, #tpu.memory_space<vmem>>, vector<1x32x32xbf16>
    %20 = vector.shape_cast %19 : vector<1x32x32xbf16> to vector<32x32xbf16>
    %cst_18 = arith.constant dense<0.000000e+00> : vector<32x128xf32>
    %21 = tpu.matmul %20, %11, %cst_18 {dimension_numbers = #tpu.dot_dimension_numbers<[1], [0], [0], [1], [0, 0, 1, 1], [], []>} : vector<32x32xbf16>, vector<32x128xbf16>, vector<32x128xf32> -> vector<32x128xf32>
    %22 = arith.addf %18, %21 : vector<32x128xf32>
    %c1_19 = arith.constant 1 : index
    %c0_20 = arith.constant 0 : index
    %c0_21 = arith.constant 0 : index
    %23 = vector.load %arg6[%c1_19, %c0_20, %c0_21] : memref<5x32x128xf32, #tpu.memory_space<vmem>>, vector<1x32x128xf32>
    %24 = vector.shape_cast %23 : vector<1x32x128xf32> to vector<32x128xf32>
    %25 = arith.addf %22, %24 : vector<32x128xf32>
    %cst_22 = arith.constant 0.000000e+00 : f32
    %26 = vector.broadcast %cst_22 : f32 to vector<32x128xf32>
    %27 = arith.maximumf %25, %26 : vector<32x128xf32>
    %28 = arith.addf %27, %8 : vector<32x128xf32>
    %c0_23 = arith.constant 0 : index
    %29 = memref.load %arg1[%c0_23] : memref<3xf32, #tpu.memory_space<smem>>
    %30 = vector.broadcast %29 : f32 to vector<32x128xf32>
    %31 = arith.mulf %30, %28 : vector<32x128xf32>
    %32 = arith.truncf %28 : vector<32x128xf32> to vector<32x128xbf16>
    %cst_24 = arith.constant dense<0.000000e+00> : vector<32x128xf32>
    %33 = tpu.matmul %32, %9, %cst_24 {dimension_numbers = #tpu.dot_dimension_numbers<[1], [0], [0], [1], [0, 0, 1, 1], [], []>} : vector<32x128xbf16>, vector<128x128xbf16>, vector<32x128xf32> -> vector<32x128xf32>
    %34 = vector.broadcast %10 : vector<1x128xf32> to vector<32x128xf32>
    %35 = arith.mulf %33, %34 : vector<32x128xf32>
    %c2 = arith.constant 2 : index
    %c0_25 = arith.constant 0 : index
    %c0_26 = arith.constant 0 : index
    %36 = vector.load %arg5[%c2, %c0_25, %c0_26] : memref<8x32x32xbf16, #tpu.memory_space<vmem>>, vector<1x32x32xbf16>
    %37 = vector.shape_cast %36 : vector<1x32x32xbf16> to vector<32x32xbf16>
    %38 = arith.truncf %35 : vector<32x128xf32> to vector<32x128xbf16>
    %cst_27 = arith.constant dense<0.000000e+00> : vector<32x128xf32>
    %39 = tpu.matmul %37, %38, %cst_27 {dimension_numbers = #tpu.dot_dimension_numbers<[1], [0], [0], [1], [0, 0, 1, 1], [], []>} : vector<32x32xbf16>, vector<32x128xbf16>, vector<32x128xf32> -> vector<32x128xf32>
    %c5 = arith.constant 5 : index
    %c0_28 = arith.constant 0 : index
    %c0_29 = arith.constant 0 : index
    %40 = vector.load %arg5[%c5, %c0_28, %c0_29] : memref<8x32x32xbf16, #tpu.memory_space<vmem>>, vector<1x32x32xbf16>
    %41 = vector.shape_cast %40 : vector<1x32x32xbf16> to vector<32x32xbf16>
    %cst_30 = arith.constant dense<0.000000e+00> : vector<32x128xf32>
    %42 = tpu.matmul %41, %32, %cst_30 {dimension_numbers = #tpu.dot_dimension_numbers<[1], [0], [0], [1], [0, 0, 1, 1], [], []>} : vector<32x32xbf16>, vector<32x128xbf16>, vector<32x128xf32> -> vector<32x128xf32>
    %43 = arith.addf %39, %42 : vector<32x128xf32>
    %c2_31 = arith.constant 2 : index
    %c0_32 = arith.constant 0 : index
    %c0_33 = arith.constant 0 : index
    %44 = vector.load %arg6[%c2_31, %c0_32, %c0_33] : memref<5x32x128xf32, #tpu.memory_space<vmem>>, vector<1x32x128xf32>
    %45 = vector.shape_cast %44 : vector<1x32x128xf32> to vector<32x128xf32>
    %46 = arith.addf %43, %45 : vector<32x128xf32>
    %cst_34 = arith.constant 0.000000e+00 : f32
    %47 = vector.broadcast %cst_34 : f32 to vector<32x128xf32>
    %48 = arith.maximumf %46, %47 : vector<32x128xf32>
    %49 = arith.addf %48, %8 : vector<32x128xf32>
    %cst_35 = arith.constant 0.699999988 : f32
    %50 = vector.broadcast %cst_35 : f32 to vector<32x128xf32>
    %51 = arith.mulf %50, %28 : vector<32x128xf32>
    %52 = arith.addf %49, %51 : vector<32x128xf32>
    %c1_36 = arith.constant 1 : index
    %53 = memref.load %arg1[%c1_36] : memref<3xf32, #tpu.memory_space<smem>>
    %54 = vector.broadcast %53 : f32 to vector<32x128xf32>
    %55 = arith.mulf %54, %52 : vector<32x128xf32>
    %56 = arith.addf %31, %55 : vector<32x128xf32>
    %57 = arith.truncf %52 : vector<32x128xf32> to vector<32x128xbf16>
    %cst_37 = arith.constant dense<0.000000e+00> : vector<32x128xf32>
    %58 = tpu.matmul %57, %9, %cst_37 {dimension_numbers = #tpu.dot_dimension_numbers<[1], [0], [0], [1], [0, 0, 1, 1], [], []>} : vector<32x128xbf16>, vector<128x128xbf16>, vector<32x128xf32> -> vector<32x128xf32>
    %59 = vector.broadcast %10 : vector<1x128xf32> to vector<32x128xf32>
    %60 = arith.mulf %58, %59 : vector<32x128xf32>
    %c3 = arith.constant 3 : index
    %c0_38 = arith.constant 0 : index
    %c0_39 = arith.constant 0 : index
    %61 = vector.load %arg5[%c3, %c0_38, %c0_39] : memref<8x32x32xbf16, #tpu.memory_space<vmem>>, vector<1x32x32xbf16>
    %62 = vector.shape_cast %61 : vector<1x32x32xbf16> to vector<32x32xbf16>
    %63 = arith.truncf %60 : vector<32x128xf32> to vector<32x128xbf16>
    %cst_40 = arith.constant dense<0.000000e+00> : vector<32x128xf32>
    %64 = tpu.matmul %62, %63, %cst_40 {dimension_numbers = #tpu.dot_dimension_numbers<[1], [0], [0], [1], [0, 0, 1, 1], [], []>} : vector<32x32xbf16>, vector<32x128xbf16>, vector<32x128xf32> -> vector<32x128xf32>
    %c6 = arith.constant 6 : index
    %c0_41 = arith.constant 0 : index
    %c0_42 = arith.constant 0 : index
    %65 = vector.load %arg5[%c6, %c0_41, %c0_42] : memref<8x32x32xbf16, #tpu.memory_space<vmem>>, vector<1x32x32xbf16>
    %66 = vector.shape_cast %65 : vector<1x32x32xbf16> to vector<32x32xbf16>
    %cst_43 = arith.constant dense<0.000000e+00> : vector<32x128xf32>
    %67 = tpu.matmul %66, %57, %cst_43 {dimension_numbers = #tpu.dot_dimension_numbers<[1], [0], [0], [1], [0, 0, 1, 1], [], []>} : vector<32x32xbf16>, vector<32x128xbf16>, vector<32x128xf32> -> vector<32x128xf32>
    %68 = arith.addf %64, %67 : vector<32x128xf32>
    %c3_44 = arith.constant 3 : index
    %c0_45 = arith.constant 0 : index
    %c0_46 = arith.constant 0 : index
    %69 = vector.load %arg6[%c3_44, %c0_45, %c0_46] : memref<5x32x128xf32, #tpu.memory_space<vmem>>, vector<1x32x128xf32>
    %70 = vector.shape_cast %69 : vector<1x32x128xf32> to vector<32x128xf32>
    %71 = arith.addf %68, %70 : vector<32x128xf32>
    %cst_47 = arith.constant 0.000000e+00 : f32
    %72 = vector.broadcast %cst_47 : f32 to vector<32x128xf32>
    %73 = arith.maximumf %71, %72 : vector<32x128xf32>
    %74 = arith.addf %73, %8 : vector<32x128xf32>
    %cst_48 = arith.constant 0.699999988 : f32
    %75 = vector.broadcast %cst_48 : f32 to vector<32x128xf32>
    %76 = arith.mulf %75, %52 : vector<32x128xf32>
    %77 = arith.addf %74, %76 : vector<32x128xf32>
    %c2_49 = arith.constant 2 : index
    %78 = memref.load %arg1[%c2_49] : memref<3xf32, #tpu.memory_space<smem>>
    %79 = vector.broadcast %78 : f32 to vector<32x128xf32>
    %80 = arith.mulf %79, %77 : vector<32x128xf32>
    %81 = arith.addf %56, %80 : vector<32x128xf32>
    %c7 = arith.constant 7 : index
    %c0_50 = arith.constant 0 : index
    %c0_51 = arith.constant 0 : index
    %82 = vector.load %arg5[%c7, %c0_50, %c0_51] : memref<8x32x32xbf16, #tpu.memory_space<vmem>>, vector<1x32x32xbf16>
    %83 = vector.shape_cast %82 : vector<1x32x32xbf16> to vector<32x32xbf16>
    %84 = arith.truncf %81 : vector<32x128xf32> to vector<32x128xbf16>
    %cst_52 = arith.constant dense<0.000000e+00> : vector<32x128xf32>
    %85 = tpu.matmul %83, %84, %cst_52 {dimension_numbers = #tpu.dot_dimension_numbers<[1], [0], [0], [1], [0, 0, 1, 1], [], []>} : vector<32x32xbf16>, vector<32x128xbf16>, vector<32x128xf32> -> vector<32x128xf32>
    %c4_53 = arith.constant 4 : index
    %c0_54 = arith.constant 0 : index
    %c0_55 = arith.constant 0 : index
    %86 = vector.load %arg6[%c4_53, %c0_54, %c0_55] : memref<5x32x128xf32, #tpu.memory_space<vmem>>, vector<1x32x128xf32>
    %87 = vector.shape_cast %86 : vector<1x32x128xf32> to vector<32x128xf32>
    %88 = arith.addf %85, %87 : vector<32x128xf32>
    %89 = vector.extract_strided_slice %88 {offsets = [0, 0], sizes = [8, 128], strides = [1, 1]} : vector<32x128xf32> to vector<8x128xf32>
    %cst_56 = arith.constant dense<0xFF800000> : vector<128xf32>
    %90 = vector.multi_reduction <maximumf>, %89, %cst_56 [0] : vector<8x128xf32> to vector<128xf32>
    %91 = vector.shape_cast %90 : vector<128xf32> to vector<1x128xf32>
    %92 = vector.broadcast %91 : vector<1x128xf32> to vector<8x128xf32>
    %93 = arith.subf %89, %92 : vector<8x128xf32>
    %94 = math.exp %93 : vector<8x128xf32>
    %cst_57 = arith.constant dense<0.000000e+00> : vector<128xf32>
    %95 = vector.multi_reduction <add>, %94, %cst_57 [0] : vector<8x128xf32> to vector<128xf32>
    %96 = vector.shape_cast %95 : vector<128xf32> to vector<1x128xf32>
    %97 = math.log %96 : vector<1x128xf32>
    %98 = vector.broadcast %97 : vector<1x128xf32> to vector<8x128xf32>
    %99 = arith.subf %93, %98 : vector<8x128xf32>
    %c0_58 = arith.constant 0 : index
    %c0_59 = arith.constant 0 : index
    %100 = vector.load %arg7[%c0_58, %c0_59] : memref<8x128xf32, #tpu.memory_space<vmem>>, vector<8x128xf32>
    tpu.vector_store %arg7[%c0_58, %c0_59], %99 {strides = array<i32>} : memref<8x128xf32, #tpu.memory_space<vmem>>, vector<8x128xf32>,
    return
  }
  func.func @transform_0(%arg0: i32, %arg1: memref<3xf32, #tpu.memory_space<smem>>) -> (i32, i32) {
    %c0_i32 = arith.constant 0 : i32
    %c0_i32_0 = arith.constant 0 : i32
    %c0_i32_1 = arith.constant 0 : i32
    return %c0_i32, %c0_i32_0 : i32, i32
  }
  func.func @transform_1(%arg0: i32, %arg1: memref<3xf32, #tpu.memory_space<smem>>) -> (i32, i32) {
    %c0_i32 = arith.constant 0 : i32
    %c0_i32_0 = arith.constant 0 : i32
    %c0_i32_1 = arith.constant 0 : i32
    return %c0_i32, %c0_i32_0 : i32, i32
  }
  func.func @transform_2(%arg0: i32, %arg1: memref<3xf32, #tpu.memory_space<smem>>) -> (i32, i32) {
    %c0_i32 = arith.constant 0 : i32
    %c0_i32_0 = arith.constant 0 : i32
    %c0_i32_1 = arith.constant 0 : i32
    return %c0_i32, %c0_i32_0 : i32, i32
  }
  func.func @transform_3(%arg0: i32, %arg1: memref<3xf32, #tpu.memory_space<smem>>) -> (i32, i32, i32) {
    %c0_i32 = arith.constant 0 : i32
    %c0_i32_0 = arith.constant 0 : i32
    %c0_i32_1 = arith.constant 0 : i32
    %c0_i32_2 = arith.constant 0 : i32
    return %c0_i32, %c0_i32_0, %c0_i32_1 : i32, i32, i32
  }
  func.func @transform_4(%arg0: i32, %arg1: memref<3xf32, #tpu.memory_space<smem>>) -> (i32, i32, i32) {
    %c0_i32 = arith.constant 0 : i32
    %c0_i32_0 = arith.constant 0 : i32
    %c0_i32_1 = arith.constant 0 : i32
    %c0_i32_2 = arith.constant 0 : i32
    return %c0_i32, %c0_i32_0, %c0_i32_1 : i32, i32, i32
  }
  func.func @transform_5(%arg0: i32, %arg1: memref<3xf32, #tpu.memory_space<smem>>) -> (i32, i32) {
    %c0_i32 = arith.constant 0 : i32
    %c0_i32_0 = arith.constant 0 : i32
    %c0_i32_1 = arith.constant 0 : i32
    return %c0_i32, %c0_i32_0 : i32, i32
  }
}

</mosaic_0001>

<llo_original>
// kernel: sage_res_forward.1
$region0: #{sage_res_forward.1}
  #allocation0 [shape = 'u32[]', space=smem, size = 0x4, offset = 0x4, fixed_abs, tag = 'smem constant byte address 0x4 - core index']
  #allocation1 [shape = 'u32[144,128]{1,0:T(1,128)}', space=vmem, size = 0x12000, scoped, tag = 'internal scratch']
  #allocation2 [shape = 's32[1]{0}', space=sflag, size = 0x4, scoped, tag = 'scoped memory for sage_res_forward.1']
  #allocation3 [shape = 'u8[512]{0}', space=smem, size = 0x200, scoped, tag = 'prefetched SMEM operand 0']
  %s0 = inlined_call_operand.vmem [shape: f32[3], index: 0, kind: input, shape index: {}]
  %s1 = inlined_call_operand.vmem [shape: bf16[32,128], index: 1, kind: input, shape index: {}]
  %s2 = inlined_call_operand.hbm [shape: bf16[128,128], index: 2, kind: input, shape index: {}]
  %s3 = inlined_call_operand.vmem [shape: f32[1,128], index: 3, kind: input, shape index: {}]
  %s4 = inlined_call_operand.hbm [shape: bf16[8,32,32], index: 4, kind: input, shape index: {}]
  %s5 = inlined_call_operand.hbm [shape: f32[5,32,128], index: 5, kind: input, shape index: {}]
  %s6 = inlined_call_operand.hbm [shape: f32[8,128], index: 6, kind: output, shape index: {}]
  %s7 = sld [smem:[#allocation0]]
  $region42: #{sage_res_forward.1} parent=0
    _
  %s9 = ssub.s32 1, %s7
  %s10 = scalar_select 0, %s9, %s7
  %s11 = sshll.u32 %s0, 4
  %s12 = int_to_ptr.vmem [resolvable:$true] %s11
  %14 = dma.vmem_to_smem %s12, 16, [#allocation3], [#allocation2]
  %15 = dma.done [#allocation2], 16
  %16 = sfence
  $region1: #{sage_res_forward.1} parent=0
    #allocation4 [shape = 'u8[32768]{0}', space=vmem, size = 0x8000, scoped, tag = 'input window, operand 2, single buffered']
    #allocation5 [shape = 's32[1]{0}', space=sflag, size = 0x4, scoped, tag = 'scoped memory for sage_res_forward.1']
    #allocation6 [shape = 's32[1]{0}', space=sflag, size = 0x4, scoped, tag = 'scoped memory for sage_res_forward.1']
    #allocation7 [shape = 'u8[65536]{0}', space=vmem, size = 0x10000, scoped, tag = 'input window, operand 4, single buffered']
    #allocation8 [shape = 's32[1]{0}', space=sflag, size = 0x4, scoped, tag = 'scoped memory for sage_res_forward.1']
    #allocation9 [shape = 'u8[81920]{0}', space=vmem, size = 0x14000, scoped, tag = 'input window, operand 5, single buffered']
    #allocation10 [shape = 'u8[4096]{0}', space=vmem, size = 0x1000, scoped, tag = 'output window, operand 0, single buffered']
    %17 = vsyncpa [#allocation5], 0
    %18 = vsyncpa [#allocation8], 0
    %19 = vsyncpa [#allocation6], 0
    // Predicated region
    $region2: #{sage_res_forward.1} parent=1 // pred_check
      _
    $region3: #{sage_res_forward.1} parent=1 // pred_check_branch
      %21 = sbr.rel (0) target = $region5
    $region4: #{sage_res_forward.1} parent=1 // pred_region
      _
    $region5: #{sage_res_forward.1} parent=1 // pred_fallthru
      _
    // Predicated region
    $region6: #{sage_res_forward.1} parent=1 // pred_check
      _
    $region7: #{sage_res_forward.1} parent=1 // pred_check_branch
      %23 = sbr.rel (0) target = $region9
    $region8: #{sage_res_forward.1} parent=1 // pred_region
      %s25 = ssub.s32 1024, 1024
      %26 = vsyncadd [#allocation5], %s25
      %s27 = sshll.u32 [#allocation4], 4
      %s28 = int_to_ptr.vmem [resolvable:$true] %s27
      %33 = dma.hbm_to_vmem [thread:$0]  %s2, 1024, %s28, [#allocation5], 64, 64, 4
    $region9: #{sage_res_forward.1} parent=1 // pred_fallthru
      _
    // Predicated region
    $region10: #{sage_res_forward.1} parent=1 // pred_check
      _
    $region11: #{sage_res_forward.1} parent=1 // pred_check_branch
      %35 = sbr.rel (0) target = $region13
    $region12: #{sage_res_forward.1} parent=1 // pred_region
      _
    $region13: #{sage_res_forward.1} parent=1 // pred_fallthru
      _
    // Predicated region
    $region14: #{sage_res_forward.1} parent=1 // pred_check
      _
    $region15: #{sage_res_forward.1} parent=1 // pred_check_branch
      %37 = sbr.rel (0) target = $region17
    $region16: #{sage_res_forward.1} parent=1 // pred_region
      %s39 = ssub.s32 2048, 2048
      %40 = vsyncadd [#allocation8], %s39
      %s41 = sshll.u32 [#allocation7], 4
      %s42 = int_to_ptr.vmem [resolvable:$true] %s41
      %47 = dma.hbm_to_vmem [thread:$0]  %s4, 2048, %s42, [#allocation8], 64, 64, 4
    $region17: #{sage_res_forward.1} parent=1 // pred_fallthru
      _
    // Predicated region
    $region18: #{sage_res_forward.1} parent=1 // pred_check
      _
    $region19: #{sage_res_forward.1} parent=1 // pred_check_branch
      %49 = sbr.rel (0) target = $region21
    $region20: #{sage_res_forward.1} parent=1 // pred_region
      %s51 = ssub.s32 2560, 2560
      %52 = vsyncadd [#allocation8], %s51
      %s53 = sshll.u32 [#allocation9], 4
      %s54 = int_to_ptr.vmem [resolvable:$true] %s53
      %59 = dma.hbm_to_vmem [thread:$0]  %s5, 2560, %s54, [#allocation8], 128, 128, 8
    $region21: #{sage_res_forward.1} parent=1 // pred_fallthru
      _
    // Predicated region
    $region22: #{sage_res_forward.1} parent=1 // pred_check
      _
    $region23: #{sage_res_forward.1} parent=1 // pred_check_branch
      %61 = sbr.rel (0) target = $region25
    $region24: #{sage_res_forward.1} parent=1 // pred_region
      %62 = dma.done [#allocation5], 1024
    $region25: #{sage_res_forward.1} parent=1 // pred_fallthru
      _
    // Predicated region
    $region26: #{sage_res_forward.1} parent=1 // pred_check
      _
    $region27: #{sage_res_forward.1} parent=1 // pred_check_branch
      %64 = sbr.rel (0) target = $region29
    $region28: #{sage_res_forward.1} parent=1 // pred_region
      %65 = dma.done [#allocation8], 2048
    $region29: #{sage_res_forward.1} parent=1 // pred_fallthru
      _
    // Predicated region
    $region30: #{sage_res_forward.1} parent=1 // pred_check
      _
    $region31: #{sage_res_forward.1} parent=1 // pred_check_branch
      %67 = sbr.rel (0) target = $region33
    $region32: #{sage_res_forward.1} parent=1 // pred_region
      %68 = dma.done [#allocation8], 2560
    $region33: #{sage_res_forward.1} parent=1 // pred_fallthru
      _
    %v70 = vld [vmem:[#allocation7] sm:$0xf]
    %v71 = vld [vmem:[#allocation7 + $0x4] sm:$0xf]
    %v72 = vld [vmem:[#allocation7 + $0x8] sm:$0xf]
    %v73 = vld [vmem:[#allocation7 + $0xc] sm:$0xf]
    %v74 = vld [vmem:[%s1] sm:$0xf]
    %v75 = vld [vmem:[%s1 + $0x4] sm:$0xf]
    %v76 = vld [vmem:[%s1 + $0x8] sm:$0xf]
    %v77 = vld [vmem:[%s1 + $0xc] sm:$0xf]
    %v78 = vld [vmem:[#allocation9] sm:$0xff]
    %v79 = vld [vmem:[#allocation9 + $0x8] sm:$0xff]
    %v80 = vld [vmem:[#allocation9 + $0x10] sm:$0xff]
    %v81 = vld [vmem:[#allocation9 + $0x18] sm:$0xff]
    %v86 = vunpack.c.l.b16 %v70
    %v87 = vunpack.c.l.b16 %v71
    %v88 = vunpack.c.l.b16 %v72
    %v89 = vunpack.c.l.b16 %v73
    %v90 = vpack.c.b16 %v87, %v86
    %v91 = vpack.c.b16 %v89, %v88
    %v96 = vunpack.c.l.b16 %v74
    %v97 = vunpack.c.l.b16 %v75
    %v98 = vunpack.c.l.b16 %v76
    %v99 = vunpack.c.l.b16 %v77
    %v100 = vpack.c.b16 %v97, %v96
    %v101 = vpack.c.b16 %v99, %v98
    %vm104 = vcmask 261120
    %v106 = vsel %vm104, %v90, 0
    %v109 = vsel %vm104, %v91, 0
    %111 = vmatprep.subr.bf16.mxu0 0
    %112 = vmatpush1.bf16.msra.mxu0 %v100
    %113 = vmatprep.subr.bf16.mxu0 0
    %114 = vmatpush1.bf16.msra.mxu0 %v101
    %115 = vmatprep.subr.bf16.mxu0 0
    %116 = vmatpush1.bf16.msra.mxu0 0
    %117 = vmatprep.subr.bf16.mxu0 0
    %118 = vmatpush1.bf16.msra.mxu0 0
    %119 = vmatprep.subr.bf16.mxu0 0
    %120 = vmatpush1.bf16.msra.mxu0 0
    %121 = vmatprep.subr.bf16.mxu0 0
    %122 = vmatpush1.bf16.msra.mxu0 0
    %123 = vmatprep.subr.bf16.mxu0 0
    %124 = vmatpush1.bf16.msra.mxu0 0
    %125 = vmatprep.subr.bf16.mxu0 0
    %126 = vmatpush1.bf16.msra.mxu0 0
    %127 = vmatprep.subr.bf16.mxu0 0
    %128 = vmatpush1.bf16.msra.mxu0 0
    %129 = vmatprep.subr.bf16.mxu0 0
    %130 = vmatpush1.bf16.msra.mxu0 0
    %131 = vmatprep.subr.bf16.mxu0 0
    %132 = vmatpush1.bf16.msra.mxu0 0
    %133 = vmatprep.subr.bf16.mxu0 0
    %134 = vmatpush1.bf16.msra.mxu0 0
    %135 = vmatprep.subr.bf16.mxu0 0
    %136 = vmatpush1.bf16.msra.mxu0 0
    %137 = vmatprep.subr.bf16.mxu0 0
    %138 = vmatpush1.bf16.msra.mxu0 0
    %139 = vmatprep.subr.bf16.mxu0 0
    %140 = vmatpush1.bf16.msra.mxu0 0
    %141 = vmatprep.subr.bf16.mxu0 0
    %142 = vmatpush1.bf16.msra.mxu0 0
    %143 = vmatprep.mubr.bf16.mxu0 0
    %144 = vmatmul.mubr.bf16.gmra.mrb[0].mxu0 %v106
    %v145 = vpop.f32.mrb[0].mxu0
    %v146 = vadd.f32 %v78, %v145
    %v147 = vpop.f32.mrb[0].mxu0
    %v148 = vpop.f32.mrb[0].mxu0
    %v149 = vadd.f32 %v79, %v148
    %v150 = vpop.f32.mrb[0].mxu0
    %151 = vmatprep.mubr.bf16.mxu0 0
    %152 = vmatmul.mubr.bf16.gmra.mrb[0].mxu0 %v109
    %v153 = vpop.f32.mrb[0].mxu0
    %v154 = vadd.f32 %v80, %v153
    %v155 = vpop.f32.mrb[0].mxu0
    %v156 = vpop.f32.mrb[0].mxu0
    %v157 = vadd.f32 %v81, %v156
    %v158 = vpop.f32.mrb[0].mxu0
    %159 = vdwg.mxu0
    %v160 = vmul.f32 %v146, 0.2
    %v161 = vmul.f32 %v149, 0.2
    %v162 = vmul.f32 %v154, 0.2
    %v163 = vmul.f32 %v157, 0.2
    %v164 = vld [vmem:[#allocation4] sm:$0xf]
    %v165 = vld [vmem:[#allocation4 + $0x4] sm:$0xf]
    %v166 = vld [vmem:[#allocation4 + $0x8] sm:$0xf]
    %v167 = vld [vmem:[#allocation4 + $0xc] sm:$0xf]
    %v168 = vld [vmem:[#allocation4 + $0x10] sm:$0xf]
    %v169 = vld [vmem:[#allocation4 + $0x14] sm:$0xf]
    %v170 = vld [vmem:[#allocation4 + $0x18] sm:$0xf]
    %v171 = vld [vmem:[#allocation4 + $0x1c] sm:$0xf]
    %v172 = vld [vmem:[#allocation4 + $0x20] sm:$0xf]
    %v173 = vld [vmem:[#allocation4 + $0x24] sm:$0xf]
    %v174 = vld [vmem:[#allocation4 + $0x28] sm:$0xf]
    %v175 = vld [vmem:[#allocation4 + $0x2c] sm:$0xf]
    %v176 = vld [vmem:[#allocation4 + $0x30] sm:$0xf]
    %v177 = vld [vmem:[#allocation4 + $0x34] sm:$0xf]
    %v178 = vld [vmem:[#allocation4 + $0x38] sm:$0xf]
    %v179 = vld [vmem:[#allocation4 + $0x3c] sm:$0xf]
    %v180 = vld [vmem:[%s3] sm:$0x1]
    %v181 = vpack.c.bf16 %v149, %v146
    %v182 = vpack.c.bf16 %v157, %v154
    %v199 = vunpack.c.l.b16 %v164
    %v200 = vunpack.c.l.b16 %v165
    %v201 = vunpack.c.l.b16 %v166
    %v202 = vunpack.c.l.b16 %v167
    %v203 = vunpack.c.l.b16 %v168
    %v204 = vunpack.c.l.b16 %v169
    %v205 = vunpack.c.l.b16 %v170
    %v206 = vunpack.c.l.b16 %v171
    %v207 = vunpack.c.l.b16 %v172
    %v208 = vunpack.c.l.b16 %v173
    %v209 = vunpack.c.l.b16 %v174
    %v210 = vunpack.c.l.b16 %v175
    %v211 = vunpack.c.l.b16 %v176
    %v212 = vunpack.c.l.b16 %v177
    %v213 = vunpack.c.l.b16 %v178
    %v214 = vunpack.c.l.b16 %v179
    %v215 = vpack.c.b16 %v200, %v199
    %v216 = vpack.c.b16 %v202, %v201
    %v217 = vpack.c.b16 %v204, %v203
    %v218 = vpack.c.b16 %v206, %v205
    %v219 = vpack.c.b16 %v208, %v207
    %v220 = vpack.c.b16 %v210, %v209
    %v221 = vpack.c.b16 %v212, %v211
    %v222 = vpack.c.b16 %v214, %v213
    %231 = vmatprep.subr.bf16.mxu0 0
    %232 = vmatpush1.bf16.msra.mxu0 %v215
    %233 = vmatprep.subr.bf16.mxu0 0
    %234 = vmatpush1.bf16.msra.mxu0 %v216
    %235 = vmatprep.subr.bf16.mxu0 0
    %236 = vmatpush1.bf16.msra.mxu0 %v217
    %237 = vmatprep.subr.bf16.mxu0 0
    %238 = vmatpush1.bf16.msra.mxu0 %v218
    %239 = vmatprep.subr.bf16.mxu0 0
    %240 = vmatpush1.bf16.msra.mxu0 %v219
    %241 = vmatprep.subr.bf16.mxu0 0
    %242 = vmatpush1.bf16.msra.mxu0 %v220
    %243 = vmatprep.subr.bf16.mxu0 0
    %244 = vmatpush1.bf16.msra.mxu0 %v221
    %245 = vmatprep.subr.bf16.mxu0 0
    %246 = vmatpush1.bf16.msra.mxu0 %v222
    %247 = vmatprep.subr.bf16.mxu0 0
    %248 = vmatpush1.bf16.msra.mxu0 0
    %249 = vmatprep.subr.bf16.mxu0 0
    %250 = vmatpush1.bf16.msra.mxu0 0
    %251 = vmatprep.subr.bf16.mxu0 0
    %252 = vmatpush1.bf16.msra.mxu0 0
    %253 = vmatprep.subr.bf16.mxu0 0
    %254 = vmatpush1.bf16.msra.mxu0 0
    %255 = vmatprep.subr.bf16.mxu0 0
    %256 = vmatpush1.bf16.msra.mxu0 0
    %257 = vmatprep.subr.bf16.mxu0 0
    %258 = vmatpush1.bf16.msra.mxu0 0
    %259 = vmatprep.subr.bf16.mxu0 0
    %260 = vmatpush1.bf16.msra.mxu0 0
    %261 = vmatprep.subr.bf16.mxu0 0
    %262 = vmatpush1.bf16.msra.mxu0 0
    %263 = vmatprep.mubr.bf16.mxu0 0
    %264 = vmatmul.mubr.bf16.gmra.mrb[0].mxu0 %v181
    %v265 = vpop.f32.mrb[0].mxu0
    %v266 = vadd.f32 0.0, %v265
    %v267 = vpop.f32.mrb[0].mxu0
    %v268 = vpop.f32.mrb[0].mxu0
    %v269 = vadd.f32 0.0, %v268
    %v270 = vpop.f32.mrb[0].mxu0
    %271 = vmatprep.mubr.bf16.mxu0 0
    %272 = vmatmul.mubr.bf16.gmra.mrb[0].mxu0 %v182
    %v273 = vpop.f32.mrb[0].mxu0
    %v274 = vadd.f32 0.0, %v273
    %v275 = vpop.f32.mrb[0].mxu0
    %v276 = vpop.f32.mrb[0].mxu0
    %v277 = vadd.f32 0.0, %v276
    %v278 = vpop.f32.mrb[0].mxu0
    %279 = vdwg.mxu0
    %v281 = vlaneseq
    %v282 = vshrl.u32 %v281, 7
    %v283 = vsub.s32 0, %v282
    %v284 = vrot.slane %v180, %v283
    %v286 = vmul.f32 %v266, %v284
    %v287 = vmul.f32 %v269, %v284
    %v288 = vmul.f32 %v274, %v284
    %v289 = vmul.f32 %v277, %v284
    %s290 = scalar_lea.vmem [#allocation7], 16
    %v291 = vld [vmem:[%s290] sm:$0xf]
    %v292 = vld [vmem:[%s290 + $0x4] sm:$0xf]
    %v293 = vld [vmem:[%s290 + $0x8] sm:$0xf]
    %v294 = vld [vmem:[%s290 + $0xc] sm:$0xf]
    %v295 = vpack.c.bf16 %v287, %v286
    %v296 = vpack.c.bf16 %v289, %v288
    %s297 = scalar_lea.vmem [#allocation7], 64
    %v298 = vld [vmem:[%s297] sm:$0xf]
    %v299 = vld [vmem:[%s297 + $0x4] sm:$0xf]
    %v300 = vld [vmem:[%s297 + $0x8] sm:$0xf]
    %v301 = vld [vmem:[%s297 + $0xc] sm:$0xf]
    %v306 = vunpack.c.l.b16 %v298
    %v307 = vunpack.c.l.b16 %v299
    %v308 = vunpack.c.l.b16 %v300
    %v309 = vunpack.c.l.b16 %v301
    %v310 = vpack.c.b16 %v307, %v306
    %v311 = vpack.c.b16 %v309, %v308
    %v313 = vsel %vm104, %v310, 0
    %v316 = vsel %vm104, %v311, 0
    %318 = vmatprep.subr.bf16.mxu0 0
    %319 = vmatpush1.bf16.msra.mxu0 %v181
    %320 = vmatprep.subr.bf16.mxu0 0
    %321 = vmatpush1.bf16.msra.mxu0 %v182
    %322 = vmatprep.subr.bf16.mxu0 0
    %323 = vmatpush1.bf16.msra.mxu0 0
    %324 = vmatprep.subr.bf16.mxu0 0
    %325 = vmatpush1.bf16.msra.mxu0 0
    %326 = vmatprep.subr.bf16.mxu0 0
    %327 = vmatpush1.bf16.msra.mxu0 0
    %328 = vmatprep.subr.bf16.mxu0 0
    %329 = vmatpush1.bf16.msra.mxu0 0
    %330 = vmatprep.subr.bf16.mxu0 0
    %331 = vmatpush1.bf16.msra.mxu0 0
    %332 = vmatprep.subr.bf16.mxu0 0
    %333 = vmatpush1.bf16.msra.mxu0 0
    %334 = vmatprep.subr.bf16.mxu0 0
    %335 = vmatpush1.bf16.msra.mxu0 0
    %336 = vmatprep.subr.bf16.mxu0 0
    %337 = vmatpush1.bf16.msra.mxu0 0
    %338 = vmatprep.subr.bf16.mxu0 0
    %339 = vmatpush1.bf16.msra.mxu0 0
    %340 = vmatprep.subr.bf16.mxu0 0
    %341 = vmatpush1.bf16.msra.mxu0 0
    %342 = vmatprep.subr.bf16.mxu0 0
    %343 = vmatpush1.bf16.msra.mxu0 0
    %344 = vmatprep.subr.bf16.mxu0 0
    %345 = vmatpush1.bf16.msra.mxu0 0
    %346 = vmatprep.subr.bf16.mxu0 0
    %347 = vmatpush1.bf16.msra.mxu0 0
    %348 = vmatprep.subr.bf16.mxu0 0
    %349 = vmatpush1.bf16.msra.mxu0 0
    %350 = vmatprep.mubr.bf16.mxu0 0
    %351 = vmatmul.mubr.bf16.gmra.mrb[0].mxu0 %v313
    %v352 = vpop.f32.mrb[0].mxu0
    %v353 = vadd.f32 0.0, %v352
    %v354 = vpop.f32.mrb[0].mxu0
    %v355 = vpop.f32.mrb[0].mxu0
    %v356 = vadd.f32 0.0, %v355
    %v357 = vpop.f32.mrb[0].mxu0
    %358 = vmatprep.mubr.bf16.mxu0 0
    %359 = vmatmul.mubr.bf16.gmra.mrb[0].mxu0 %v316
    %v360 = vpop.f32.mrb[0].mxu0
    %v361 = vadd.f32 0.0, %v360
    %v362 = vpop.f32.mrb[0].mxu0
    %v363 = vpop.f32.mrb[0].mxu0
    %v364 = vadd.f32 0.0, %v363
    %v365 = vpop.f32.mrb[0].mxu0
    %366 = vdwg.mxu0
    %v371 = vunpack.c.l.b16 %v291
    %v372 = vunpack.c.l.b16 %v292
    %v373 = vunpack.c.l.b16 %v293
    %v374 = vunpack.c.l.b16 %v294
    %v375 = vpack.c.b16 %v372, %v371
    %v376 = vpack.c.b16 %v374, %v373
    %v378 = vsel %vm104, %v375, 0
    %v381 = vsel %vm104, %v376, 0
    %383 = vmatprep.subr.bf16.mxu0 0
    %384 = vmatpush1.bf16.msra.mxu0 %v295
    %385 = vmatprep.subr.bf16.mxu0 0
    %386 = vmatpush1.bf16.msra.mxu0 %v296
    %387 = vmatprep.subr.bf16.mxu0 0
    %388 = vmatpush1.bf16.msra.mxu0 0
    %389 = vmatprep.subr.bf16.mxu0 0
    %390 = vmatpush1.bf16.msra.mxu0 0
    %391 = vmatprep.subr.bf16.mxu0 0
    %392 = vmatpush1.bf16.msra.mxu0 0
    %393 = vmatprep.subr.bf16.mxu0 0
    %394 = vmatpush1.bf16.msra.mxu0 0
    %395 = vmatprep.subr.bf16.mxu0 0
    %396 = vmatpush1.bf16.msra.mxu0 0
    %397 = vmatprep.subr.bf16.mxu0 0
    %398 = vmatpush1.bf16.msra.mxu0 0
    %399 = vmatprep.subr.bf16.mxu0 0
    %400 = vmatpush1.bf16.msra.mxu0 0
    %401 = vmatprep.subr.bf16.mxu0 0
    %402 = vmatpush1.bf16.msra.mxu0 0
    %403 = vmatprep.subr.bf16.mxu0 0
    %404 = vmatpush1.bf16.msra.mxu0 0
    %405 = vmatprep.subr.bf16.mxu0 0
    %406 = vmatpush1.bf16.msra.mxu0 0
    %407 = vmatprep.subr.bf16.mxu0 0
    %408 = vmatpush1.bf16.msra.mxu0 0
    %409 = vmatprep.subr.bf16.mxu0 0
    %410 = vmatpush1.bf16.msra.mxu0 0
    %411 = vmatprep.subr.bf16.mxu0 0
    %412 = vmatpush1.bf16.msra.mxu0 0
    %413 = vmatprep.subr.bf16.mxu0 0
    %414 = vmatpush1.bf16.msra.mxu0 0
    %415 = vmatprep.mubr.bf16.mxu0 0
    %416 = vmatmul.mubr.bf16.gmra.mrb[0].mxu0 %v378
    %v417 = vpop.f32.mrb[0].mxu0
    %v418 = vadd.f32 %v353, %v417
    %v419 = vpop.f32.mrb[0].mxu0
    %v420 = vpop.f32.mrb[0].mxu0
    %v421 = vadd.f32 %v356, %v420
    %v422 = vpop.f32.mrb[0].mxu0
    %423 = vmatprep.mubr.bf16.mxu0 0
    %424 = vmatmul.mubr.bf16.gmra.mrb[0].mxu0 %v381
    %v425 = vpop.f32.mrb[0].mxu0
    %v426 = vadd.f32 %v361, %v425
    %v427 = vpop.f32.mrb[0].mxu0
    %v428 = vpop.f32.mrb[0].mxu0
    %v429 = vadd.f32 %v364, %v428
    %v430 = vpop.f32.mrb[0].mxu0
    %431 = vdwg.mxu0
    %s432 = scalar_lea.vmem [#allocation9], 32
    %v433 = vld [vmem:[%s432] sm:$0xff]
    %v434 = vld [vmem:[%s432 + $0x8] sm:$0xff]
    %v435 = vld [vmem:[%s432 + $0x10] sm:$0xff]
    %v436 = vld [vmem:[%s432 + $0x18] sm:$0xff]
    %v437 = vadd.f32 %v418, %v433
    %v438 = vadd.f32 %v421, %v434
    %v439 = vadd.f32 %v426, %v435
    %v440 = vadd.f32 %v429, %v436
    %v441 = vmax.f32 %v437, 0.0
    %v442 = vmax.f32 %v438, 0.0
    %v443 = vmax.f32 %v439, 0.0
    %v444 = vmax.f32 %v440, 0.0
    %v445 = vadd.f32 %v441, %v160
    %v446 = vadd.f32 %v442, %v161
    %v447 = vadd.f32 %v443, %v162
    %v448 = vadd.f32 %v444, %v163
    %s449 = sld [smem:[#allocation3]]
    %v450 = vstv %s449
    %v451 = vmul.f32 %v450, %v445
    %v452 = vmul.f32 %v450, %v446
    %v453 = vmul.f32 %v450, %v447
    %v454 = vmul.f32 %v450, %v448
    %v455 = vpack.c.bf16 %v446, %v445
    %v456 = vpack.c.bf16 %v448, %v447
    %457 = vmatprep.subr.bf16.mxu0 0
    %458 = vmatpush1.bf16.msra.mxu0 %v215
    %459 = vmatprep.subr.bf16.mxu0 0
    %460 = vmatpush1.bf16.msra.mxu0 %v216
    %461 = vmatprep.subr.bf16.mxu0 0
    %462 = vmatpush1.bf16.msra.mxu0 %v217
    %463 = vmatprep.subr.bf16.mxu0 0
    %464 = vmatpush1.bf16.msra.mxu0 %v218
    %465 = vmatprep.subr.bf16.mxu0 0
    %466 = vmatpush1.bf16.msra.mxu0 %v219
    %467 = vmatprep.subr.bf16.mxu0 0
    %468 = vmatpush1.bf16.msra.mxu0 %v220
    %469 = vmatprep.subr.bf16.mxu0 0
    %470 = vmatpush1.bf16.msra.mxu0 %v221
    %471 = vmatprep.subr.bf16.mxu0 0
    %472 = vmatpush1.bf16.msra.mxu0 %v222
    %473 = vmatprep.subr.bf16.mxu0 0
    %474 = vmatpush1.bf16.msra.mxu0 0
    %475 = vmatprep.subr.bf16.mxu0 0
    %476 = vmatpush1.bf16.msra.mxu0 0
    %477 = vmatprep.subr.bf16.mxu0 0
    %478 = vmatpush1.bf16.msra.mxu0 0
    %479 = vmatprep.subr.bf16.mxu0 0
    %480 = vmatpush1.bf16.msra.mxu0 0
    %481 = vmatprep.subr.bf16.mxu0 0
    %482 = vmatpush1.bf16.msra.mxu0 0
    %483 = vmatprep.subr.bf16.mxu0 0
    %484 = vmatpush1.bf16.msra.mxu0 0
    %485 = vmatprep.subr.bf16.mxu0 0
    %486 = vmatpush1.bf16.msra.mxu0 0
    %487 = vmatprep.subr.bf16.mxu0 0
    %488 = vmatpush1.bf16.msra.mxu0 0
    %489 = vmatprep.mubr.bf16.mxu0 0
    %490 = vmatmul.mubr.bf16.gmra.mrb[0].mxu0 %v455
    %v491 = vpop.f32.mrb[0].mxu0
    %v492 = vadd.f32 0.0, %v491
    %v493 = vpop.f32.mrb[0].mxu0
    %v494 = vpop.f32.mrb[0].mxu0
    %v495 = vadd.f32 0.0, %v494
    %v496 = vpop.f32.mrb[0].mxu0
    %497 = vmatprep.mubr.bf16.mxu0 0
    %498 = vmatmul.mubr.bf16.gmra.mrb[0].mxu0 %v456
    %v499 = vpop.f32.mrb[0].mxu0
    %v500 = vadd.f32 0.0, %v499
    %v501 = vpop.f32.mrb[0].mxu0
    %v502 = vpop.f32.mrb[0].mxu0
    %v503 = vadd.f32 0.0, %v502
    %v504 = vpop.f32.mrb[0].mxu0
    %505 = vdwg.mxu0
    %v506 = vmul.f32 %v492, %v284
    %v507 = vmul.f32 %v495, %v284
    %v508 = vmul.f32 %v500, %v284
    %v509 = vmul.f32 %v503, %v284
    %s510 = scalar_lea.vmem [#allocation7], 32
    %v511 = vld [vmem:[%s510] sm:$0xf]
    %v512 = vld [vmem:[%s510 + $0x4] sm:$0xf]
    %v513 = vld [vmem:[%s510 + $0x8] sm:$0xf]
    %v514 = vld [vmem:[%s510 + $0xc] sm:$0xf]
    %v515 = vpack.c.bf16 %v507, %v506
    %v516 = vpack.c.bf16 %v509, %v508
    %s517 = scalar_lea.vmem [#allocation7], 80
    %v518 = vld [vmem:[%s517] sm:$0xf]
    %v519 = vld [vmem:[%s517 + $0x4] sm:$0xf]
    %v520 = vld [vmem:[%s517 + $0x8] sm:$0xf]
    %v521 = vld [vmem:[%s517 + $0xc] sm:$0xf]
    %v526 = vunpack.c.l.b16 %v518
    %v527 = vunpack.c.l.b16 %v519
    %v528 = vunpack.c.l.b16 %v520
    %v529 = vunpack.c.l.b16 %v521
    %v530 = vpack.c.b16 %v527, %v526
    %v531 = vpack.c.b16 %v529, %v528
    %v533 = vsel %vm104, %v530, 0
    %v536 = vsel %vm104, %v531, 0
    %538 = vmatprep.subr.bf16.mxu0 0
    %539 = vmatpush1.bf16.msra.mxu0 %v455
    %540 = vmatprep.subr.bf16.mxu0 0
    %541 = vmatpush1.bf16.msra.mxu0 %v456
    %542 = vmatprep.subr.bf16.mxu0 0
    %543 = vmatpush1.bf16.msra.mxu0 0
    %544 = vmatprep.subr.bf16.mxu0 0
    %545 = vmatpush1.bf16.msra.mxu0 0
    %546 = vmatprep.subr.bf16.mxu0 0
    %547 = vmatpush1.bf16.msra.mxu0 0
    %548 = vmatprep.subr.bf16.mxu0 0
    %549 = vmatpush1.bf16.msra.mxu0 0
    %550 = vmatprep.subr.bf16.mxu0 0
    %551 = vmatpush1.bf16.msra.mxu0 0
    %552 = vmatprep.subr.bf16.mxu0 0
    %553 = vmatpush1.bf16.msra.mxu0 0
    %554 = vmatprep.subr.bf16.mxu0 0
    %555 = vmatpush1.bf16.msra.mxu0 0
    %556 = vmatprep.subr.bf16.mxu0 0
    %557 = vmatpush1.bf16.msra.mxu0 0
    %558 = vmatprep.subr.bf16.mxu0 0
    %559 = vmatpush1.bf16.msra.mxu0 0
    %560 = vmatprep.subr.bf16.mxu0 0
    %561 = vmatpush1.bf16.msra.mxu0 0
    %562 = vmatprep.subr.bf16.mxu0 0
    %563 = vmatpush1.bf16.msra.mxu0 0
    %564 = vmatprep.subr.bf16.mxu0 0
    %565 = vmatpush1.bf16.msra.mxu0 0
    %566 = vmatprep.subr.bf16.mxu0 0
    %567 = vmatpush1.bf16.msra.mxu0 0
    %568 = vmatprep.subr.bf16.mxu0 0
    %569 = vmatpush1.bf16.msra.mxu0 0
    %570 = vmatprep.mubr.bf16.mxu0 0
    %571 = vmatmul.mubr.bf16.gmra.mrb[0].mxu0 %v533
    %v572 = vpop.f32.mrb[0].mxu0
    %v573 = vadd.f32 0.0, %v572
    %v574 = vpop.f32.mrb[0].mxu0
    %v575 = vpop.f32.mrb[0].mxu0
    %v576 = vadd.f32 0.0, %v575
    %v577 = vpop.f32.mrb[0].mxu0
    %578 = vmatprep.mubr.bf16.mxu0 0
    %579 = vmatmul.mubr.bf16.gmra.mrb[0].mxu0 %v536
    %v580 = vpop.f32.mrb[0].mxu0
    %v581 = vadd.f32 0.0, %v580
    %v582 = vpop.f32.mrb[0].mxu0
    %v583 = vpop.f32.mrb[0].mxu0
    %v584 = vadd.f32 0.0, %v583
    %v585 = vpop.f32.mrb[0].mxu0
    %586 = vdwg.mxu0
    %v591 = vunpack.c.l.b16 %v511
    %v592 = vunpack.c.l.b16 %v512
    %v593 = vunpack.c.l.b16 %v513
    %v594 = vunpack.c.l.b16 %v514
    %v595 = vpack.c.b16 %v592, %v591
    %v596 = vpack.c.b16 %v594, %v593
    %v598 = vsel %vm104, %v595, 0
    %v601 = vsel %vm104, %v596, 0
    %603 = vmatprep.subr.bf16.mxu0 0
    %604 = vmatpush1.bf16.msra.mxu0 %v515
    %605 = vmatprep.subr.bf16.mxu0 0
    %606 = vmatpush1.bf16.msra.mxu0 %v516
    %607 = vmatprep.subr.bf16.mxu0 0
    %608 = vmatpush1.bf16.msra.mxu0 0
    %609 = vmatprep.subr.bf16.mxu0 0
    %610 = vmatpush1.bf16.msra.mxu0 0
    %611 = vmatprep.subr.bf16.mxu0 0
    %612 = vmatpush1.bf16.msra.mxu0 0
    %613 = vmatprep.subr.bf16.mxu0 0
    %614 = vmatpush1.bf16.msra.mxu0 0
    %615 = vmatprep.subr.bf16.mxu0 0
    %616 = vmatpush1.bf16.msra.mxu0 0
    %617 = vmatprep.subr.bf16.mxu0 0
    %618 = vmatpush1.bf16.msra.mxu0 0
    %619 = vmatprep.subr.bf16.mxu0 0
    %620 = vmatpush1.bf16.msra.mxu0 0
    %621 = vmatprep.subr.bf16.mxu0 0
    %622 = vmatpush1.bf16.msra.mxu0 0
    %623 = vmatprep.subr.bf16.mxu0 0
    %624 = vmatpush1.bf16.msra.mxu0 0
    %625 = vmatprep.subr.bf16.mxu0 0
    %626 = vmatpush1.bf16.msra.mxu0 0
    %627 = vmatprep.subr.bf16.mxu0 0
    %628 = vmatpush1.bf16.msra.mxu0 0
    %629 = vmatprep.subr.bf16.mxu0 0
    %630 = vmatpush1.bf16.msra.mxu0 0
    %631 = vmatprep.subr.bf16.mxu0 0
    %632 = vmatpush1.bf16.msra.mxu0 0
    %633 = vmatprep.subr.bf16.mxu0 0
    %634 = vmatpush1.bf16.msra.mxu0 0
    %635 = vmatprep.mubr.bf16.mxu0 0
    %636 = vmatmul.mubr.bf16.gmra.mrb[0].mxu0 %v598
    %v637 = vpop.f32.mrb[0].mxu0
    %v638 = vadd.f32 %v573, %v637
    %v639 = vpop.f32.mrb[0].mxu0
    %v640 = vpop.f32.mrb[0].mxu0
    %v641 = vadd.f32 %v576, %v640
    %v642 = vpop.f32.mrb[0].mxu0
    %643 = vmatprep.mubr.bf16.mxu0 0
    %644 = vmatmul.mubr.bf16.gmra.mrb[0].mxu0 %v601
    %v645 = vpop.f32.mrb[0].mxu0
    %v646 = vadd.f32 %v581, %v645
    %v647 = vpop.f32.mrb[0].mxu0
    %v648 = vpop.f32.mrb[0].mxu0
    %v649 = vadd.f32 %v584, %v648
    %v650 = vpop.f32.mrb[0].mxu0
    %651 = vdwg.mxu0
    %s652 = scalar_lea.vmem [#allocation9], 64
    %v653 = vld [vmem:[%s652] sm:$0xff]
    %v654 = vld [vmem:[%s652 + $0x8] sm:$0xff]
    %v655 = vld [vmem:[%s652 + $0x10] sm:$0xff]
    %v656 = vld [vmem:[%s652 + $0x18] sm:$0xff]
    %v657 = vadd.f32 %v638, %v653
    %v658 = vadd.f32 %v641, %v654
    %v659 = vadd.f32 %v646, %v655
    %v660 = vadd.f32 %v649, %v656
    %v661 = vmax.f32 %v657, 0.0
    %v662 = vmax.f32 %v658, 0.0
    %v663 = vmax.f32 %v659, 0.0
    %v664 = vmax.f32 %v660, 0.0
    %v665 = vadd.f32 %v661, %v160
    %v666 = vadd.f32 %v662, %v161
    %v667 = vadd.f32 %v663, %v162
    %v668 = vadd.f32 %v664, %v163
    %v669 = vmul.f32 %v445, 0.7
    %v670 = vmul.f32 %v446, 0.7
    %v671 = vmul.f32 %v447, 0.7
    %v672 = vmul.f32 %v448, 0.7
    %v673 = vadd.f32 %v665, %v669
    %v674 = vadd.f32 %v666, %v670
    %v675 = vadd.f32 %v667, %v671
    %v676 = vadd.f32 %v668, %v672
    %s677 = sld [smem:[#allocation3 + $0x1]]
    %v678 = vstv %s677
    %v679 = vmul.f32 %v678, %v673
    %v680 = vmul.f32 %v678, %v674
    %v681 = vmul.f32 %v678, %v675
    %v682 = vmul.f32 %v678, %v676
    %v683 = vadd.f32 %v451, %v679
    %v684 = vadd.f32 %v452, %v680
    %v685 = vadd.f32 %v453, %v681
    %v686 = vadd.f32 %v454, %v682
    %v687 = vpack.c.bf16 %v674, %v673
    %v688 = vpack.c.bf16 %v676, %v675
    %689 = vmatprep.subr.bf16.mxu0 0
    %690 = vmatpush1.bf16.msra.mxu0 %v215
    %691 = vmatprep.subr.bf16.mxu0 0
    %692 = vmatpush1.bf16.msra.mxu0 %v216
    %693 = vmatprep.subr.bf16.mxu0 0
    %694 = vmatpush1.bf16.msra.mxu0 %v217
    %695 = vmatprep.subr.bf16.mxu0 0
    %696 = vmatpush1.bf16.msra.mxu0 %v218
    %697 = vmatprep.subr.bf16.mxu0 0
    %698 = vmatpush1.bf16.msra.mxu0 %v219
    %699 = vmatprep.subr.bf16.mxu0 0
    %700 = vmatpush1.bf16.msra.mxu0 %v220
    %701 = vmatprep.subr.bf16.mxu0 0
    %702 = vmatpush1.bf16.msra.mxu0 %v221
    %703 = vmatprep.subr.bf16.mxu0 0
    %704 = vmatpush1.bf16.msra.mxu0 %v222
    %705 = vmatprep.subr.bf16.mxu0 0
    %706 = vmatpush1.bf16.msra.mxu0 0
    %707 = vmatprep.subr.bf16.mxu0 0
    %708 = vmatpush1.bf16.msra.mxu0 0
    %709 = vmatprep.subr.bf16.mxu0 0
    %710 = vmatpush1.bf16.msra.mxu0 0
    %711 = vmatprep.subr.bf16.mxu0 0
    %712 = vmatpush1.bf16.msra.mxu0 0
    %713 = vmatprep.subr.bf16.mxu0 0
    %714 = vmatpush1.bf16.msra.mxu0 0
    %715 = vmatprep.subr.bf16.mxu0 0
    %716 = vmatpush1.bf16.msra.mxu0 0
    %717 = vmatprep.subr.bf16.mxu0 0
    %718 = vmatpush1.bf16.msra.mxu0 0
    %719 = vmatprep.subr.bf16.mxu0 0
    %720 = vmatpush1.bf16.msra.mxu0 0
    %721 = vmatprep.mubr.bf16.mxu0 0
    %722 = vmatmul.mubr.bf16.gmra.mrb[0].mxu0 %v687
    %v723 = vpop.f32.mrb[0].mxu0
    %v724 = vadd.f32 0.0, %v723
    %v725 = vpop.f32.mrb[0].mxu0
    %v726 = vpop.f32.mrb[0].mxu0
    %v727 = vadd.f32 0.0, %v726
    %v728 = vpop.f32.mrb[0].mxu0
    %729 = vmatprep.mubr.bf16.mxu0 0
    %730 = vmatmul.mubr.bf16.gmra.mrb[0].mxu0 %v688
    %v731 = vpop.f32.mrb[0].mxu0
    %v732 = vadd.f32 0.0, %v731
    %v733 = vpop.f32.mrb[0].mxu0
    %v734 = vpop.f32.mrb[0].mxu0
    %v735 = vadd.f32 0.0, %v734
    %v736 = vpop.f32.mrb[0].mxu0
    %737 = vdwg.mxu0
    %v738 = vmul.f32 %v724, %v284
    %v739 = vmul.f32 %v727, %v284
    %v740 = vmul.f32 %v732, %v284
    %v741 = vmul.f32 %v735, %v284
    %s742 = scalar_lea.vmem [#allocation7], 48
    %v743 = vld [vmem:[%s742] sm:$0xf]
    %v744 = vld [vmem:[%s742 + $0x4] sm:$0xf]
    %v745 = vld [vmem:[%s742 + $0x8] sm:$0xf]
    %v746 = vld [vmem:[%s742 + $0xc] sm:$0xf]
    %v747 = vpack.c.bf16 %v739, %v738
    %v748 = vpack.c.bf16 %v741, %v740
    %s749 = scalar_lea.vmem [#allocation7], 96
    %v750 = vld [vmem:[%s749] sm:$0xf]
    %v751 = vld [vmem:[%s749 + $0x4] sm:$0xf]
    %v752 = vld [vmem:[%s749 + $0x8] sm:$0xf]
    %v753 = vld [vmem:[%s749 + $0xc] sm:$0xf]
    %v758 = vunpack.c.l.b16 %v750
    %v759 = vunpack.c.l.b16 %v751
    %v760 = vunpack.c.l.b16 %v752
    %v761 = vunpack.c.l.b16 %v753
    %v762 = vpack.c.b16 %v759, %v758
    %v763 = vpack.c.b16 %v761, %v760
    %v765 = vsel %vm104, %v762, 0
    %v768 = vsel %vm104, %v763, 0
    %770 = vmatprep.subr.bf16.mxu0 0
    %771 = vmatpush1.bf16.msra.mxu0 %v687
    %772 = vmatprep.subr.bf16.mxu0 0
    %773 = vmatpush1.bf16.msra.mxu0 %v688
    %774 = vmatprep.subr.bf16.mxu0 0
    %775 = vmatpush1.bf16.msra.mxu0 0
    %776 = vmatprep.subr.bf16.mxu0 0
    %777 = vmatpush1.bf16.msra.mxu0 0
    %778 = vmatprep.subr.bf16.mxu0 0
    %779 = vmatpush1.bf16.msra.mxu0 0
    %780 = vmatprep.subr.bf16.mxu0 0
    %781 = vmatpush1.bf16.msra.mxu0 0
    %782 = vmatprep.subr.bf16.mxu0 0
    %783 = vmatpush1.bf16.msra.mxu0 0
    %784 = vmatprep.subr.bf16.mxu0 0
    %785 = vmatpush1.bf16.msra.mxu0 0
    %786 = vmatprep.subr.bf16.mxu0 0
    %787 = vmatpush1.bf16.msra.mxu0 0
    %788 = vmatprep.subr.bf16.mxu0 0
    %789 = vmatpush1.bf16.msra.mxu0 0
    %790 = vmatprep.subr.bf16.mxu0 0
    %791 = vmatpush1.bf16.msra.mxu0 0
    %792 = vmatprep.subr.bf16.mxu0 0
    %793 = vmatpush1.bf16.msra.mxu0 0
    %794 = vmatprep.subr.bf16.mxu0 0
    %795 = vmatpush1.bf16.msra.mxu0 0
    %796 = vmatprep.subr.bf16.mxu0 0
    %797 = vmatpush1.bf16.msra.mxu0 0
    %798 = vmatprep.subr.bf16.mxu0 0
    %799 = vmatpush1.bf16.msra.mxu0 0
    %800 = vmatprep.subr.bf16.mxu0 0
    %801 = vmatpush1.bf16.msra.mxu0 0
    %802 = vmatprep.mubr.bf16.mxu0 0
    %803 = vmatmul.mubr.bf16.gmra.mrb[0].mxu0 %v765
    %v804 = vpop.f32.mrb[0].mxu0
    %v805 = vadd.f32 0.0, %v804
    %v806 = vpop.f32.mrb[0].mxu0
    %v807 = vpop.f32.mrb[0].mxu0
    %v808 = vadd.f32 0.0, %v807
    %v809 = vpop.f32.mrb[0].mxu0
    %810 = vmatprep.mubr.bf16.mxu0 0
    %811 = vmatmul.mubr.bf16.gmra.mrb[0].mxu0 %v768
    %v812 = vpop.f32.mrb[0].mxu0
    %v813 = vadd.f32 0.0, %v812
    %v814 = vpop.f32.mrb[0].mxu0
    %v815 = vpop.f32.mrb[0].mxu0
    %v816 = vadd.f32 0.0, %v815
    %v817 = vpop.f32.mrb[0].mxu0
    %818 = vdwg.mxu0
    %v823 = vunpack.c.l.b16 %v743
    %v824 = vunpack.c.l.b16 %v744
    %v825 = vunpack.c.l.b16 %v745
    %v826 = vunpack.c.l.b16 %v746
    %v827 = vpack.c.b16 %v824, %v823
    %v828 = vpack.c.b16 %v826, %v825
    %v830 = vsel %vm104, %v827, 0
    %v833 = vsel %vm104, %v828, 0
    %835 = vmatprep.subr.bf16.mxu0 0
    %836 = vmatpush1.bf16.msra.mxu0 %v747
    %837 = vmatprep.subr.bf16.mxu0 0
    %838 = vmatpush1.bf16.msra.mxu0 %v748
    %839 = vmatprep.subr.bf16.mxu0 0
    %840 = vmatpush1.bf16.msra.mxu0 0
    %841 = vmatprep.subr.bf16.mxu0 0
    %842 = vmatpush1.bf16.msra.mxu0 0
    %843 = vmatprep.subr.bf16.mxu0 0
    %844 = vmatpush1.bf16.msra.mxu0 0
    %845 = vmatprep.subr.bf16.mxu0 0
    %846 = vmatpush1.bf16.msra.mxu0 0
    %847 = vmatprep.subr.bf16.mxu0 0
    %848 = vmatpush1.bf16.msra.mxu0 0
    %849 = vmatprep.subr.bf16.mxu0 0
    %850 = vmatpush1.bf16.msra.mxu0 0
    %851 = vmatprep.subr.bf16.mxu0 0
    %852 = vmatpush1.bf16.msra.mxu0 0
    %853 = vmatprep.subr.bf16.mxu0 0
    %854 = vmatpush1.bf16.msra.mxu0 0
    %855 = vmatprep.subr.bf16.mxu0 0
    %856 = vmatpush1.bf16.msra.mxu0 0
    %857 = vmatprep.subr.bf16.mxu0 0
    %858 = vmatpush1.bf16.msra.mxu0 0
    %859 = vmatprep.subr.bf16.mxu0 0
    %860 = vmatpush1.bf16.msra.mxu0 0
    %861 = vmatprep.subr.bf16.mxu0 0
    %862 = vmatpush1.bf16.msra.mxu0 0
    %863 = vmatprep.subr.bf16.mxu0 0
    %864 = vmatpush1.bf16.msra.mxu0 0
    %865 = vmatprep.subr.bf16.mxu0 0
    %866 = vmatpush1.bf16.msra.mxu0 0
    %867 = vmatprep.mubr.bf16.mxu0 0
    %868 = vmatmul.mubr.bf16.gmra.mrb[0].mxu0 %v830
    %v869 = vpop.f32.mrb[0].mxu0
    %v870 = vadd.f32 %v805, %v869
    %v871 = vpop.f32.mrb[0].mxu0
    %v872 = vpop.f32.mrb[0].mxu0
    %v873 = vadd.f32 %v808, %v872
    %v874 = vpop.f32.mrb[0].mxu0
    %875 = vmatprep.mubr.bf16.mxu0 0
    %876 = vmatmul.mubr.bf16.gmra.mrb[0].mxu0 %v833
    %v877 = vpop.f32.mrb[0].mxu0
    %v878 = vadd.f32 %v813, %v877
    %v879 = vpop.f32.mrb[0].mxu0
    %v880 = vpop.f32.mrb[0].mxu0
    %v881 = vadd.f32 %v816, %v880
    %v882 = vpop.f32.mrb[0].mxu0
    %883 = vdwg.mxu0
    %s884 = scalar_lea.vmem [#allocation9], 96
    %v885 = vld [vmem:[%s884] sm:$0xff]
    %v886 = vld [vmem:[%s884 + $0x8] sm:$0xff]
    %v887 = vld [vmem:[%s884 + $0x10] sm:$0xff]
    %v888 = vld [vmem:[%s884 + $0x18] sm:$0xff]
    %v889 = vadd.f32 %v870, %v885
    %v890 = vadd.f32 %v873, %v886
    %v891 = vadd.f32 %v878, %v887
    %v892 = vadd.f32 %v881, %v888
    %v893 = vmax.f32 %v889, 0.0
    %v894 = vmax.f32 %v890, 0.0
    %v895 = vmax.f32 %v891, 0.0
    %v896 = vmax.f32 %v892, 0.0
    %v897 = vadd.f32 %v893, %v160
    %v898 = vadd.f32 %v894, %v161
    %v899 = vadd.f32 %v895, %v162
    %v900 = vadd.f32 %v896, %v163
    %v901 = vmul.f32 %v673, 0.7
    %v902 = vmul.f32 %v674, 0.7
    %v903 = vmul.f32 %v675, 0.7
    %v904 = vmul.f32 %v676, 0.7
    %v905 = vadd.f32 %v897, %v901
    %v906 = vadd.f32 %v898, %v902
    %v907 = vadd.f32 %v899, %v903
    %v908 = vadd.f32 %v900, %v904
    %s909 = sld [smem:[#allocation3 + $0x2]]
    %v910 = vstv %s909
    %v911 = vmul.f32 %v910, %v905
    %v912 = vmul.f32 %v910, %v906
    %v913 = vmul.f32 %v910, %v907
    %v914 = vmul.f32 %v910, %v908
    %v915 = vadd.f32 %v683, %v911
    %v916 = vadd.f32 %v684, %v912
    %v917 = vadd.f32 %v685, %v913
    %v918 = vadd.f32 %v686, %v914
    %s919 = scalar_lea.vmem [#allocation7], 112
    %v920 = vld [vmem:[%s919] sm:$0xf]
    %v921 = vld [vmem:[%s919 + $0x4] sm:$0xf]
    %v922 = vld [vmem:[%s919 + $0x8] sm:$0xf]
    %v923 = vld [vmem:[%s919 + $0xc] sm:$0xf]
    %v924 = vpack.c.bf16 %v916, %v915
    %v925 = vpack.c.bf16 %v918, %v917
    %s926 = scalar_lea.vmem [#allocation9], 128
    %v927 = vld [vmem:[%s926] sm:$0xff]
    %v932 = vunpack.c.l.b16 %v920
    %v933 = vunpack.c.l.b16 %v921
    %v934 = vunpack.c.l.b16 %v922
    %v935 = vunpack.c.l.b16 %v923
    %v936 = vpack.c.b16 %v933, %v932
    %v937 = vpack.c.b16 %v935, %v934
    %v939 = vsel %vm104, %v936, 0
    %v942 = vsel %vm104, %v937, 0
    %944 = vmatprep.subr.bf16.mxu0 0
    %945 = vmatpush1.bf16.msra.mxu0 %v924
    %946 = vmatprep.subr.bf16.mxu0 0
    %947 = vmatpush1.bf16.msra.mxu0 %v925
    %948 = vmatprep.subr.bf16.mxu0 0
    %949 = vmatpush1.bf16.msra.mxu0 0
    %950 = vmatprep.subr.bf16.mxu0 0
    %951 = vmatpush1.bf16.msra.mxu0 0
    %952 = vmatprep.subr.bf16.mxu0 0
    %953 = vmatpush1.bf16.msra.mxu0 0
    %954 = vmatprep.subr.bf16.mxu0 0
    %955 = vmatpush1.bf16.msra.mxu0 0
    %956 = vmatprep.subr.bf16.mxu0 0
    %957 = vmatpush1.bf16.msra.mxu0 0
    %958 = vmatprep.subr.bf16.mxu0 0
    %959 = vmatpush1.bf16.msra.mxu0 0
    %960 = vmatprep.subr.bf16.mxu0 0
    %961 = vmatpush1.bf16.msra.mxu0 0
    %962 = vmatprep.subr.bf16.mxu0 0
    %963 = vmatpush1.bf16.msra.mxu0 0
    %964 = vmatprep.subr.bf16.mxu0 0
    %965 = vmatpush1.bf16.msra.mxu0 0
    %966 = vmatprep.subr.bf16.mxu0 0
    %967 = vmatpush1.bf16.msra.mxu0 0
    %968 = vmatprep.subr.bf16.mxu0 0
    %969 = vmatpush1.bf16.msra.mxu0 0
    %970 = vmatprep.subr.bf16.mxu0 0
    %971 = vmatpush1.bf16.msra.mxu0 0
    %972 = vmatprep.subr.bf16.mxu0 0
    %973 = vmatpush1.bf16.msra.mxu0 0
    %974 = vmatprep.subr.bf16.mxu0 0
    %975 = vmatpush1.bf16.msra.mxu0 0
    %976 = vmatprep.mubr.bf16.mxu0 0
    %977 = vmatmul.mubr.bf16.gmra.mrb[0].mxu0 %v939
    %v978 = vpop.f32.mrb[0].mxu0
    %v979 = vadd.f32 %v927, %v978
    %v980 = vpop.f32.mrb[0].mxu0
    %v981 = vpop.f32.mrb[0].mxu0
    %v982 = vpop.f32.mrb[0].mxu0
    %983 = vmatprep.mubr.bf16.mxu0 0
    %984 = vmatmul.mubr.bf16.gmra.mrb[0].mxu0 %v942
    %v985 = vpop.f32.mrb[0].mxu0
    %v986 = vpop.f32.mrb[0].mxu0
    %v987 = vpop.f32.mrb[0].mxu0
    %v988 = vpop.f32.mrb[0].mxu0
    %989 = vdwg.mxu0
    %v990 = vrot.slane %v979, 4
    %v991 = vmax.f32 %v979, %v990
    %v992 = vrot.slane %v991, 2
    %v993 = vmax.f32 %v991, %v992
    %v994 = vrot.slane %v993, 1
    %v995 = vmax.f32 %v993, %v994
    %v996 = vsub.f32 %v979, %v995
    %v997 = vmul.f32 %v996, 1.442695
    %v998 = vpow.pop %v997
    %v999 = vrot.slane %v998, 4
    %v1000 = vadd.f32 %v998, %v999
    %v1001 = vrot.slane %v1000, 2
    %v1002 = vadd.f32 %v1000, %v1001
    %v1003 = vrot.slane %v1002, 1
    %v1004 = vadd.f32 %v1002, %v1003
    %v1005 = vlog2.pop %v1004
    %v1006 = vmul.f32 %v1005, 0.6931472
    %v1007 = vsub.f32 %v996, %v1006
    %1008 = vst [vmem:[#allocation10] sm:$0xff] %v1007
    // Predicated region
    $region34: #{sage_res_forward.1} parent=1 // pred_check
      _
    $region35: #{sage_res_forward.1} parent=1 // pred_check_branch
      %1010 = sbr.rel (0) target = $region37
    $region36: #{sage_res_forward.1} parent=1 // pred_region
      %s1012 = ssub.s32 128, 128
      %1013 = vsyncadd [#allocation6], %s1012
      %s1015 = sshll.u32 [#allocation10], 4
      %s1016 = int_to_ptr.vmem [resolvable:$true] %s1015
      %1018 = dma.vmem_to_hbm [thread:$0]  %s1016, 128, %s6, [#allocation6]
    $region37: #{sage_res_forward.1} parent=1 // pred_fallthru
      _
    // Predicated region
    $region38: #{sage_res_forward.1} parent=1 // pred_check
      _
    $region39: #{sage_res_forward.1} parent=1 // pred_check_branch
      %1020 = sbr.rel (0) target = $region41
    $region40: #{sage_res_forward.1} parent=1 // pred_region
      %1021 = dma.done [#allocation6], 128
    $region41: #{sage_res_forward.1} parent=1 // pred_fallthru
      _
    %1022 = vsyncpa [#allocation5], 1
    %1023 = vsyncpa [#allocation8], 1
    %1024 = vsyncpa [#allocation6], 1

</llo_original>
